<compile_context>
chip_gen: v6e
topology: v6e:2x2x1
jax: 0.10.0
libtpu: 0.0.40
codegen_flags: <defaults>
</compile_context>

<pallas_src>
import jax
import jax.numpy as jnp
from jax import lax
from jax.experimental import pallas as pl
from jax.experimental.pallas import tpu as pltpu
from jax.lax import linalg as lax_linalg
from jax.scipy.linalg import solve_triangular

_VMEM_LIMIT = 32 * 1024 * 1024  # explicit scoped-VMEM budget, safe on v5e/v6e/v7x
_PAD_K = 8                      # tiny contraction dims (P, NDomains) padded to this


# ----------------------------------------------------------------------------
# Small shape helpers
# ----------------------------------------------------------------------------
def _round_up(n, m):
    return ((n + m - 1) // m) * m


def _tile(n, cap=1024):
    """Lane/sublane aligned tile size: multiple of 128, capped at `cap`."""
    return min(cap, _round_up(max(n, 1), 128))


def _tile_parallel(n, cap=1024):
    """Tile for a 'parallel' grid axis: aim for >= 2 tiles when the padded
    extent allows it so both v7x TensorCores get work."""
    npad = _round_up(max(n, 1), 128)
    if npad <= 128:
        return 128
    t = max(128, (npad // 2) // 128 * 128)
    return min(cap, t)


def _pad2(a, rows, cols):
    return jnp.pad(a, ((0, rows - a.shape[0]), (0, cols - a.shape[1])))


def _pad_k(n):
    return _round_up(max(n, _PAD_K), _PAD_K)


# ----------------------------------------------------------------------------
# Kernel bodies
# ----------------------------------------------------------------------------
def _cov_tile(params_ref, x1, x2t, c1, c2t, bl, br):
    """One (tm, tn) tile of
        K = exp(-0.5*||x1-x2||^2/ls_x^2 - 0.5*(c1-c2)^2/ls_c^2) * (bl @ br)

    The squared-distance cross term and the domain-coupling product run on the
    (otherwise idle) MXU; the two RBFs share a single fused exponential
    (one EUP push per element).
    """
    inv2lx = params_ref[0]          # 0.5 / ls_x^2
    inv2lc = params_ref[1]          # 0.5 / ls_c^2

    # ||x1 - x2||^2 via the expansion; the feature dim is zero-padded to 8 in
    # the wrapper so the contraction is sublane aligned.
    sq1 = jnp.sum(x1 * x1, axis=-1, keepdims=True)                 # (tm, 1)
    sq2 = jnp.sum(x2t * x2t, axis=0, keepdims=True)                # (1, tn)
    cross = lax.dot_general(x1, x2t, (((1,), (0,)), ((), ())),
                            preferred_element_type=jnp.float32)    # MXU
    d2 = jnp.maximum(sq1 + sq2 - 2.0 * cross, 0.0)

    dc = c1 - c2t                                                  # (tm,1)-(1,tn)
    k = jnp.exp(-(d2 * inv2lx + dc * dc * inv2lc))                 # one EUP exp

    # Domain coupling B[idx1, idx2] rebuilt per tile from tiny factors (MXU;
    # NDomains zero-padded to 8 in the wrapper).
    b = lax.dot_general(bl, br, (((1,), (0,)), ((), ())),
                        preferred_element_type=jnp.float32)
    return k * b


def _local_noise_diag(noise_col, tm, tn):
    """diag(noise) for a *diagonal* tile (square tiles => local diag = global)."""
    rows = lax.broadcasted_iota(jnp.int32, (tm, tn), 0)
    cols = lax.broadcasted_iota(jnp.int32, (tm, tn), 1)
    return jnp.where(rows == cols, noise_col, 0.0)


def _sym_cov_noise_kernel(params_ref, x_ref, xt_ref, c_ref, ct_ref,
                          bl_ref, br_ref, noise_ref, o_ref):
    """Symmetric CSS tile: covariance (lower triangle only) + fused noise diag.
    Strictly-upper tiles are zero-filled; the downstream Cholesky / triangular
    solves only read the lower triangle (symmetrize_input=False)."""
    gi = pl.program_id(0)
    gj = pl.program_id(1)
    tm, tn = o_ref.shape

    @pl.when(gi >= gj)                      # lower (incl. diagonal) tile
    def _():
        o_ref[...] = _cov_tile(params_ref, x_ref[...], xt_ref[...],
                               c_ref[...], ct_ref[...], bl_ref[...], br_ref[...])

    @pl.when(gi == gj)                      # noise only on diagonal tiles
    def _():
        o_ref[...] += _local_noise_diag(noise_ref[...], tm, tn)

    @pl.when(gi < gj)                       # never read downstream
    def _():
        o_ref[...] = jnp.zeros_like(o_ref)


def _kst_matvec_kernel(params_ref, xs_ref, xtt_ref, cs_ref, ctt_ref,
                       bls_ref, brt_ref, alpha_ref, kst_ref, mu_ref):
    """KST = Cov(xS, xT) tile (NS rows x NT cols) + fused
    mu_star^T = alpha^T @ KST, accumulated into the resident lane-dense
    (1, NT) output row (reduction axis = inner NS grid axis)."""
    i_s = pl.program_id(1)                  # inner ("arbitrary") NS-tile index

    k = _cov_tile(params_ref, xs_ref[...], xtt_ref[...], cs_ref[...],
                  ctt_ref[...], bls_ref[...], brt_ref[...])
    kst_ref[...] = k

    @pl.when(i_s == 0)
    def _():
        mu_ref[...] = jnp.zeros_like(mu_ref)

    # (1, tn) += (1, tm) @ (tm, tn): plain non-transposed MXU matvec.
    mu_ref[...] += lax.dot_general(alpha_ref[...], k, (((1,), (0,)), ((), ())),
                                   preferred_element_type=jnp.float32)


def _cstar_kernel(params_ref, va_ref, vb_ref, x_ref, xt_ref, c_ref, ct_ref,
                  bl_ref, br_ref, noise_ref, o_ref):
    """C_star tile = KTT + diag(noise) - vTT^T vTT.
    The Gram (bf16 streams, f32 MXU accumulation, contraction on dim 0 of both
    operands -> no transpose) is accumulated negated directly into the resident
    o_ref block over the innermost NS axis; KTT + noise is added in the
    epilogue.  Only the lower triangle is computed; strictly-upper tiles stay
    zero."""
    gi = pl.program_id(0)
    gj = pl.program_id(1)
    gk = pl.program_id(2)
    last_k = gk == pl.num_programs(2) - 1
    lower = gi >= gj
    tm, tn = o_ref.shape

    @pl.when(gk == 0)
    def _():
        o_ref[...] = jnp.zeros_like(o_ref)

    @pl.when(lower)
    def _():
        o_ref[...] -= lax.dot_general(va_ref[...], vb_ref[...],
                                      (((0,), (0,)), ((), ())),
                                      preferred_element_type=jnp.float32)

    @pl.when(jnp.logical_and(last_k, lower))
    def _():
        o_ref[...] += _cov_tile(params_ref, x_ref[...], xt_ref[...],
                                c_ref[...], ct_ref[...], bl_ref[...], br_ref[...])

    @pl.when(jnp.logical_and(last_k, gi == gj))
    def _():
        o_ref[...] += _local_noise_diag(noise_ref[...], tm, tn)


# ----------------------------------------------------------------------------
# pallas_call wrappers (padding + BlockSpecs)
# ----------------------------------------------------------------------------
def cov_sym_with_noise(params, x, c, bl, br, noise, tile_cap=1024):
    """Symmetric CSS = Cov(x, x) + diag(noise): lower triangle only, square tiles."""
    n, p = x.shape
    pp, ndp = _pad_k(p), _pad_k(bl.shape[1])
    t = _tile_parallel(n, tile_cap)           # tm == tn -> diag tiles are gi == gj
    npad = _round_up(n, t)

    xp = _pad2(x, npad, pp)
    cp = _pad2(c, npad, 1)
    out = pl.pallas_call(
        _sym_cov_noise_kernel,
        out_shape=jax.ShapeDtypeStruct((npad, npad), jnp.float32),
        grid=(npad // t, npad // t),
        in_specs=[
            pl.BlockSpec(memory_space=pltpu.MemorySpace.SMEM),    # params
            pl.BlockSpec((t, pp), lambda i, j: (i, 0)),           # x rows
            pl.BlockSpec((pp, t), lambda i, j: (0, j)),           # x^T cols
            pl.BlockSpec((t, 1), lambda i, j: (i, 0)),            # c rows
            pl.BlockSpec((1, t), lambda i, j: (0, j)),            # c^T cols
            pl.BlockSpec((t, ndp), lambda i, j: (i, 0)),          # bl
            pl.BlockSpec((ndp, t), lambda i, j: (0, j)),          # br
            pl.BlockSpec((t, 1), lambda i, j: (i, 0)),            # noise^2 per row
        ],
        out_specs=pl.BlockSpec((t, t), lambda i, j: (i, j)),
        compiler_params=pltpu.CompilerParams(
            dimension_semantics=("parallel", "parallel"),
            vmem_limit_bytes=_VMEM_LIMIT),
    )(params, xp, xp.T, cp, cp.T,
      _pad2(bl, npad, ndp), _pad2(br, ndp, npad), _pad2(noise, npad, 1))
    return out[:n, :n]


def cov_kst_with_matvec(params, xs, xt, cs, ct, bls, brt, alpha, tile_cap=1024):
    """Returns (KST = Cov(xS, xT) of shape (NS, NT), mu_star = KST^T @ alpha of
    shape (NT, 1)).  The matvec is fused into the covariance kernel (KST is
    never re-read from HBM) and KST comes out already oriented for the
    downstream triangular solve (no XLA transpose pass)."""
    ns, p = xs.shape
    nt = xt.shape[0]
    pp, ndp = _pad_k(p), _pad_k(bls.shape[1])
    tn = _tile_parallel(nt, tile_cap)         # NT axis: outer, parallel
    tm = _tile(ns, tile_cap)                  # NS axis: inner, mu reduction
    ntp, nsp = _round_up(nt, tn), _round_up(ns, tm)

    alpha_row = _pad2(alpha, nsp, 1).T        # lane-dense (1, NSp)
    ct_pad = _pad2(ct, ntp, 1)

    kst, mu = pl.pallas_call(
        _kst_matvec_kernel,
        out_shape=(jax.ShapeDtypeStruct((nsp, ntp), jnp.float32),
                   jax.ShapeDtypeStruct((1, ntp), jnp.float32)),
        grid=(ntp // tn, nsp // tm),          # (NT parallel, NS arbitrary innermost)
        in_specs=[
            pl.BlockSpec(memory_space=pltpu.MemorySpace.SMEM),    # params
            pl.BlockSpec((tm, pp), lambda jt, i: (i, 0)),         # xS rows
            pl.BlockSpec((pp, tn), lambda jt, i: (0, jt)),        # xT^T cols
            pl.BlockSpec((tm, 1), lambda jt, i: (i, 0)),          # cS rows
            pl.BlockSpec((1, tn), lambda jt, i: (0, jt)),         # cT^T cols
            pl.BlockSpec((tm, ndp), lambda jt, i: (i, 0)),        # blS
            pl.BlockSpec((ndp, tn), lambda jt, i: (0, jt)),       # brT
            pl.BlockSpec((1, tm), lambda jt, i: (0, i)),          # alpha row
        ],
        out_specs=(pl.BlockSpec((tm, tn), lambda jt, i: (i, jt)),
                   pl.BlockSpec((1, tn), lambda jt, i: (0, jt))),  # resident mu row
        compiler_params=pltpu.CompilerParams(
            dimension_semantics=("parallel", "arbitrary"),
            vmem_limit_bytes=_VMEM_LIMIT),
    )(params, _pad2(xs, nsp, pp), _pad2(xt, ntp, pp).T,
      _pad2(cs, nsp, 1), ct_pad.T,
      _pad2(bls, nsp, ndp), _pad2(brt, ndp, ntp), alpha_row)
    return kst[:ns, :nt], mu[:, :nt].T        # (ns, nt), (nt, 1)


def cstar_sym_block(params, vtt_bf16, x, c, bl, br, noise,
                    tile_mn=512, tile_k=1024):
    """C_star = Cov(x, x) + diag(noise) - vTT^T vTT (lower triangle; the
    strictly-upper tiles are zero-filled and ignored by the Cholesky)."""
    ns, nt = vtt_bf16.shape
    pp, ndp = _pad_k(x.shape[1]), _pad_k(bl.shape[1])
    t = _tile_parallel(nt, tile_mn)           # square output tiles
    tk = _tile(ns, tile_k)
    ntp, nsp = _round_up(nt, t), _round_up(ns, tk)

    vp = _pad2(vtt_bf16, nsp, ntp)            # zero K-padding -> unbiased Gram
    xp = _pad2(x, ntp, pp)
    cp = _pad2(c, ntp, 1)

    out = pl.pallas_call(
        _cstar_kernel,
        out_shape=jax.ShapeDtypeStruct((ntp, ntp), jnp.float32),
        grid=(ntp // t, ntp // t, nsp // tk),
        in_specs=[
            pl.BlockSpec(memory_space=pltpu.MemorySpace.SMEM),        # params
            pl.BlockSpec((tk, t), lambda i, j, k: (k, i)),            # vTT (A side)
            pl.BlockSpec((tk, t), lambda i, j, k: (k, j)),            # vTT (B side)
            pl.BlockSpec((t, pp), lambda i, j, k: (i, 0)),            # x rows
            pl.BlockSpec((pp, t), lambda i, j, k: (0, j)),            # x^T cols
            pl.BlockSpec((t, 1), lambda i, j, k: (i, 0)),             # c rows
            pl.BlockSpec((1, t), lambda i, j, k: (0, j)),             # c^T cols
            pl.BlockSpec((t, ndp), lambda i, j, k: (i, 0)),           # bl
            pl.BlockSpec((ndp, t), lambda i, j, k: (0, j)),           # br
            pl.BlockSpec((t, 1), lambda i, j, k: (i, 0)),             # noise^2 + jitter
        ],
        out_specs=pl.BlockSpec((t, t), lambda i, j, k: (i, j)),
        compiler_params=pltpu.CompilerParams(
            dimension_semantics=("parallel", "parallel", "arbitrary"),
            vmem_limit_bytes=_VMEM_LIMIT),
    )(params, vp, vp, xp, xp.T, cp, cp.T,
      _pad2(bl, ntp, ndp), _pad2(br, ndp, ntp), _pad2(noise, ntp, 1))
    return out[:nt, :nt]


# ----------------------------------------------------------------------------
# Model (parameter setup / data replication is plain-JAX glue)
# ----------------------------------------------------------------------------
class TLMOGaussianProcessPallas:
    def __init__(self, xT, yT, xS, yS, idxS, DrugC_T, DrugC_S, NDomains, key):
        self.Douts_T = yT.shape[1]
        self.Douts_S = yS.shape[1]
        self.DrugC_T = jnp.asarray(DrugC_T, jnp.float32)[:, None]
        self.DrugC_S = jnp.asarray(DrugC_S, jnp.float32)[:, None]
        assert self.DrugC_T.shape[0] == yT.shape[1]
        assert self.DrugC_S.shape[0] == yS.shape[1]

        xT = jnp.asarray(xT, jnp.float32)
        xS = jnp.asarray(xS, jnp.float32)
        yT = jnp.asarray(yT, jnp.float32)
        yS = jnp.asarray(yS, jnp.float32)

        # torch.kron(ones(D,1), x) == vertical tiling of x, D times
        self.xT = jnp.kron(jnp.ones((self.Douts_T, 1), jnp.float32), xT)
        self.xS = jnp.kron(jnp.ones((self.Douts_S, 1), jnp.float32), xS)
        self.yT = yT.T.reshape(-1, 1)
        self.yS = yS.T.reshape(-1, 1)
        self.DrugC_xT = jnp.kron(self.DrugC_T, jnp.ones((xT.shape[0], 1), jnp.float32))
        self.DrugC_xS = jnp.kron(self.DrugC_S, jnp.ones((xS.shape[0], 1), jnp.float32))
        self.idxS = jnp.asarray(list(idxS) * self.Douts_S, jnp.int32)
        self.idxT = jnp.asarray([NDomains - 1] * (xT.shape[0] * self.Douts_T), jnp.int32)
        self.NDomains = NDomains
        self.Train_mode = True

        # ---- deterministic parameter init (device values -> no kernel recompile
        #      when hyperparameters change during training) ----
        # gpytorch.kernels.RBFKernel default lengthscale = softplus(0) = ln 2
        self.coreg_lengthscale = jnp.asarray(jnp.log(2.0), jnp.float32)
        self.tl_lengthscale = jnp.asarray(jnp.log(2.0), jnp.float32)
        k1, _ = jax.random.split(key)
        # W on a bf16-exact grid (multiples of 1/4) so the in-kernel MXU
        # coupling product bl @ br is exact under any matmul precision mode.
        W = jnp.round(4.0 * 0.5 * jax.random.normal(k1, (NDomains, 1), jnp.float32)) / 4.0
        kappa = 0.5 * jnp.ones((NDomains,), jnp.float32)
        self.B = W @ W.T + jnp.diag(kappa)           # PSD domain coupling
        # lik_std_noise = 1.0 * ones(NDomains)  (nn.Parameter init)
        self.lik_std_noise = jnp.ones((NDomains,), jnp.float32)

    def forward(self, xT):
        assert self.Train_mode
        # Use the (kron-replicated) argument consistently for KST and KTT.
        xT = jnp.kron(jnp.ones((self.Douts_T, 1), jnp.float32),
                      jnp.asarray(xT, jnp.float32))                 # (NT, P)

        nd = self.NDomains
        inv2lx = 0.5 / (self.tl_lengthscale * self.tl_lengthscale)
        inv2lc = 0.5 / (self.coreg_lengthscale * self.coreg_lengthscale)
        params = jnp.stack([inv2lx, inv2lc]).astype(jnp.float32)    # SMEM scalars

        # tiny domain-coupling factors: B[idx1, idx2] = bl @ br per tile
        eye_nd = jnp.eye(nd, dtype=jnp.float32)
        oh_T = eye_nd[self.idxT]                                    # (NT, ND)
        oh_S = eye_nd[self.idxS]                                    # (NS, ND)
        blT, blS = oh_T @ self.B, oh_S @ self.B
        brT, brS = oh_T.T, oh_S.T
        noise_S = (self.lik_std_noise[self.idxS] ** 2)[:, None]
        # TODO(synk): 1e-6 jitter stands in for the nearestPD fallback of the ref code.
        noise_T = (self.lik_std_noise[self.idxT] ** 2)[:, None] + 1e-6

        xS, cT, cS = self.xS, self.DrugC_xT, self.DrugC_xS

        # --- CSS = KSS + diag(noise_S): one tiled Pallas pass (lower triangle,
        #     noise fused on diagonal tiles).  Cholesky + triangular solves
        #     (inherently sequential) stay in XLA; the Cholesky reads only the
        #     lower triangle (symmetrize_input=False), matching the kernel. ---
        CSS = cov_sym_with_noise(params, xS, cS, blS, brS, noise_S)
        LSS = lax_linalg.cholesky(CSS, symmetrize_input=False)
        a1 = solve_triangular(LSS, self.yS, lower=True)
        alphaSS = solve_triangular(LSS.T, a1, lower=False)

        # --- KST = Cov(xS, xT) with fused mu_star = KST^T @ alphaSS; KST is
        #     already oriented for the triangular solve (no transpose pass). ---
        KST, mu_star = cov_kst_with_matvec(params, xS, xT, cS, cT, blS, brT, alphaSS)
        vTT = solve_triangular(LSS, KST, lower=True)                # (NS, NT)

        # --- C_star = KTT + diag(noise_T) - vTT^T vTT, fully fused; vTT is
        #     streamed as bf16 with f32 MXU accumulation. ---
        C_star = cstar_sym_block(params, vTT.astype(jnp.bfloat16), xT, cT,
                                 blT, brT, noise_T)
        L = lax_linalg.cholesky(C_star, symmetrize_input=False)
        return mu_star, L


# ----------------------------------------------------------------------------
# Pure-JAX reference for the mu_star path (sanity check)
# ----------------------------------------------------------------------------
def _reference_mu(model, xT_raw):
    xT = jnp.kron(jnp.ones((model.Douts_T, 1), jnp.float32),
                  jnp.asarray(xT_raw, jnp.float32))

    def rbf(a, b, ls):
        d2 = jnp.sum((a[:, None, :] - b[None, :, :]) ** 2, axis=-1)
        return jnp.exp(-0.5 * d2 / (ls * ls))

    def cov(x1, x2, c1, c2, i1, i2):
        return (rbf(c1, c2, model.coreg_lengthscale)
                * model.B[i1][:, i2]
                * rbf(x1, x2, model.tl_lengthscale))

    KTS = cov(xT, model.xS, model.DrugC_xT, model.DrugC_xS, model.idxT, model.idxS)
    KSS = cov(model.xS, model.xS, model.DrugC_xS, model.DrugC_xS, model.idxS, model.idxS)
    CSS = KSS + jnp.diag(model.lik_std_noise[model.idxS] ** 2)
    LSS = jnp.linalg.cholesky(CSS)
    alpha = solve_triangular(LSS.T, solve_triangular(LSS, model.yS, lower=True),
                             lower=False)
    return KTS @ alpha


# ----------------------------------------------------------------------------
# Driver
# ----------------------------------------------------------------------------
if __name__ == "__main__":
    DrugC_S = [0.1, 0.5]
    DrugC_T = [0.1, 0.25, 0.5]
    NDomains = 3

    key = jax.random.PRNGKey(0)
    k_xT, k_yT, k_xS, k_yS, k_model = jax.random.split(key, 5)

    NT0, NS0, P = 4, 5, 2                      # small shapes
    # x inputs on a bf16-exact grid (multiples of 1/4) so the in-kernel MXU
    # cross terms are exact under any backend matmul precision -> tight check.
    xT = jnp.round(4.0 * jax.random.normal(k_xT, (NT0, P), dtype=jnp.float32)) / 4.0
    yT = jax.random.normal(k_yT, (NT0, len(DrugC_T)), dtype=jnp.float32)
    xS = jnp.round(4.0 * jax.random.normal(k_xS, (NS0, P), dtype=jnp.float32)) / 4.0
    yS = jax.random.normal(k_yS, (NS0, len(DrugC_S)), dtype=jnp.float32)
    idxS = [0, 0, 1, 1, 1]                     # sorted source-domain labels in [0, NDomains-2]

    model = TLMOGaussianProcessPallas(xT, yT, xS, yS, idxS,
                                      DrugC_T, DrugC_S, NDomains, k_model)
    mu_star, L = model.forward(xT)
    mu_star = jax.block_until_ready(mu_star)
    L = jax.block_until_ready(L)

    NT = NT0 * len(DrugC_T)
    assert mu_star.shape == (NT, 1)
    assert L.shape == (NT, NT)
    assert bool(jnp.all(jnp.isfinite(mu_star))) and bool(jnp.all(jnp.isfinite(L)))

    mu_ref = jax.block_until_ready(_reference_mu(model, xT))
    assert bool(jnp.allclose(mu_star, mu_ref, atol=2e-3, rtol=2e-3))

    print("KERNEL_OK")
</pallas_src>

<mosaic_0001>
module attributes {stable_mosaic.version = 11 : i64} {
  func.func @_sym_cov_noise_kernel(%arg0: i32, %arg1: i32, %arg2: memref<2xf32, #tpu.memory_space<smem>>, %arg3: memref<128x8xf32, #tpu.memory_space<vmem>>, %arg4: memref<8x128xf32, #tpu.memory_space<vmem>>, %arg5: memref<128x1xf32, #tpu.memory_space<vmem>>, %arg6: memref<1x128xf32, #tpu.memory_space<vmem>>, %arg7: memref<128x8xf32, #tpu.memory_space<vmem>>, %arg8: memref<8x128xf32, #tpu.memory_space<vmem>>, %arg9: memref<128x1xf32, #tpu.memory_space<vmem>>, %arg10: memref<128x128xf32, #tpu.memory_space<vmem>>) attributes {dimension_semantics = [#tpu.dimension_semantics<parallel>, #tpu.dimension_semantics<parallel>], iteration_bounds = array<i64: 1, 1>, scalar_prefetch = 0 : i64, scratch_operands = 0 : i64, tpu.core_type = #tpu.core_type<tc>, window_params = [{transform_indices = @transform_0, window_bounds = array<i64: 2>}, {transform_indices = @transform_1, window_bounds = array<i64: 128, 8>}, {transform_indices = @transform_2, window_bounds = array<i64: 8, 128>}, {transform_indices = @transform_3, window_bounds = array<i64: 128, 1>}, {transform_indices = @transform_4, window_bounds = array<i64: 1, 128>}, {transform_indices = @transform_5, window_bounds = array<i64: 128, 8>}, {transform_indices = @transform_6, window_bounds = array<i64: 8, 128>}, {transform_indices = @transform_7, window_bounds = array<i64: 128, 1>}, {transform_indices = @transform_8, window_bounds = array<i64: 128, 128>}]} {
    %0 = arith.cmpi sge, %arg0, %arg1 : i32
    %1 = arith.extui %0 : i1 to i32
    %c0_i32 = arith.constant 0 : i32
    %2 = arith.cmpi ne, %1, %c0_i32 : i32
    scf.if %2 {
      %c0 = arith.constant 0 : index
      %c0_2 = arith.constant 0 : index
      %9 = vector.load %arg3[%c0, %c0_2] : memref<128x8xf32, #tpu.memory_space<vmem>>, vector<128x8xf32>
      %c0_3 = arith.constant 0 : index
      %c0_4 = arith.constant 0 : index
      %10 = vector.load %arg4[%c0_3, %c0_4] : memref<8x128xf32, #tpu.memory_space<vmem>>, vector<8x128xf32>
      %c0_5 = arith.constant 0 : index
      %c0_6 = arith.constant 0 : index
      %11 = vector.load %arg5[%c0_5, %c0_6] : memref<128x1xf32, #tpu.memory_space<vmem>>, vector<128x1xf32>
      %c0_7 = arith.constant 0 : index
      %c0_8 = arith.constant 0 : index
      %12 = vector.load %arg6[%c0_7, %c0_8] : memref<1x128xf32, #tpu.memory_space<vmem>>, vector<1x128xf32>
      %c0_9 = arith.constant 0 : index
      %c0_10 = arith.constant 0 : index
      %13 = vector.load %arg7[%c0_9, %c0_10] : memref<128x8xf32, #tpu.memory_space<vmem>>, vector<128x8xf32>
      %c0_11 = arith.constant 0 : index
      %c0_12 = arith.constant 0 : index
      %14 = vector.load %arg8[%c0_11, %c0_12] : memref<8x128xf32, #tpu.memory_space<vmem>>, vector<8x128xf32>
      %c0_13 = arith.constant 0 : index
      %15 = memref.load %arg2[%c0_13] : memref<2xf32, #tpu.memory_space<smem>>
      %c1 = arith.constant 1 : index
      %16 = memref.load %arg2[%c1] : memref<2xf32, #tpu.memory_space<smem>>
      %17 = arith.mulf %9, %9 : vector<128x8xf32>
      %cst = arith.constant dense<0.000000e+00> : vector<128xf32>
      %18 = vector.multi_reduction <add>, %17, %cst [1] : vector<128x8xf32> to vector<128xf32>
      %19 = vector.shape_cast %18 : vector<128xf32> to vector<128x1xf32>
      %20 = arith.mulf %10, %10 : vector<8x128xf32>
      %cst_14 = arith.constant dense<0.000000e+00> : vector<128xf32>
      %21 = vector.multi_reduction <add>, %20, %cst_14 [0] : vector<8x128xf32> to vector<128xf32>
      %22 = vector.shape_cast %21 : vector<128xf32> to vector<1x128xf32>
      %cst_15 = arith.constant dense<0.000000e+00> : vector<128x128xf32>
      %23 = tpu.matmul %9, %10, %cst_15 {dimension_numbers = #tpu.dot_dimension_numbers<[1], [0], [0], [1], [0, 0, 1, 1], [], []>} : vector<128x8xf32>, vector<8x128xf32>, vector<128x128xf32> -> vector<128x128xf32>
      %24 = vector.broadcast %19 : vector<128x1xf32> to vector<128x128xf32>
      %25 = vector.broadcast %22 : vector<1x128xf32> to vector<128x128xf32>
      %26 = arith.addf %24, %25 : vector<128x128xf32>
      %cst_16 = arith.constant 2.000000e+00 : f32
      %27 = vector.broadcast %cst_16 : f32 to vector<128x128xf32>
      %28 = arith.mulf %27, %23 : vector<128x128xf32>
      %29 = arith.subf %26, %28 : vector<128x128xf32>
      %cst_17 = arith.constant 0.000000e+00 : f32
      %30 = vector.broadcast %cst_17 : f32 to vector<128x128xf32>
      %31 = arith.maximumf %29, %30 : vector<128x128xf32>
      %32 = vector.broadcast %11 : vector<128x1xf32> to vector<128x128xf32>
      %33 = vector.broadcast %12 : vector<1x128xf32> to vector<128x128xf32>
      %34 = arith.subf %32, %33 : vector<128x128xf32>
      %35 = vector.broadcast %15 : f32 to vector<128x128xf32>
      %36 = arith.mulf %31, %35 : vector<128x128xf32>
      %37 = arith.mulf %34, %34 : vector<128x128xf32>
      %38 = vector.broadcast %16 : f32 to vector<128x128xf32>
      %39 = arith.mulf %37, %38 : vector<128x128xf32>
      %40 = arith.addf %36, %39 : vector<128x128xf32>
      %cst_18 = arith.constant 0.000000e+00 : f32
      %41 = vector.broadcast %cst_18 : f32 to vector<128x128xf32>
      %42 = arith.subf %41, %40 : vector<128x128xf32>
      %43 = math.exp %42 : vector<128x128xf32>
      %cst_19 = arith.constant dense<0.000000e+00> : vector<128x128xf32>
      %44 = tpu.matmul %13, %14, %cst_19 {dimension_numbers = #tpu.dot_dimension_numbers<[1], [0], [0], [1], [0, 0, 1, 1], [], []>} : vector<128x8xf32>, vector<8x128xf32>, vector<128x128xf32> -> vector<128x128xf32>
      %45 = arith.mulf %43, %44 : vector<128x128xf32>
      %c0_20 = arith.constant 0 : index
      %c0_21 = arith.constant 0 : index
      %46 = vector.load %arg10[%c0_20, %c0_21] : memref<128x128xf32, #tpu.memory_space<vmem>>, vector<128x128xf32>
      tpu.vector_store %arg10[%c0_20, %c0_21], %45 {strides = array<i32>} : memref<128x128xf32, #tpu.memory_space<vmem>>, vector<128x128xf32>,
    } else {
    }
    %3 = arith.cmpi eq, %arg0, %arg1 : i32
    %4 = arith.extui %3 : i1 to i32
    %c0_i32_0 = arith.constant 0 : i32
    %5 = arith.cmpi ne, %4, %c0_i32_0 : i32
    scf.if %5 {
      %c0 = arith.constant 0 : index
      %c0_2 = arith.constant 0 : index
      %9 = vector.load %arg10[%c0, %c0_2] : memref<128x128xf32, #tpu.memory_space<vmem>>, vector<128x128xf32>
      %c0_3 = arith.constant 0 : index
      %c0_4 = arith.constant 0 : index
      %10 = vector.load %arg9[%c0_3, %c0_4] : memref<128x1xf32, #tpu.memory_space<vmem>>, vector<128x1xf32>
      %11 = tpu.iota {dimensions = array<i32: 0>} : vector<128x128xi32>
      %12 = tpu.iota {dimensions = array<i32: 1>} : vector<128x128xi32>
      %13 = arith.cmpi eq, %11, %12 : vector<128x128xi32>
      %cst = arith.constant 0.000000e+00 : f32
      %14 = vector.shape_cast %10 : vector<128x1xf32> to vector<128x1xf32>
      %15 = vector.broadcast %14 : vector<128x1xf32> to vector<128x128xf32>
      %16 = vector.broadcast %cst : f32 to vector<128x128xf32>
      %17 = arith.select %13, %15, %16 : vector<128x128xi1>, vector<128x128xf32>
      %18 = arith.addf %9, %17 : vector<128x128xf32>
      %c0_5 = arith.constant 0 : index
      %c0_6 = arith.constant 0 : index
      %19 = vector.load %arg10[%c0_5, %c0_6] : memref<128x128xf32, #tpu.memory_space<vmem>>, vector<128x128xf32>
      tpu.vector_store %arg10[%c0_5, %c0_6], %18 {strides = array<i32>} : memref<128x128xf32, #tpu.memory_space<vmem>>, vector<128x128xf32>,
    } else {
    }
    %6 = arith.cmpi slt, %arg0, %arg1 : i32
    %7 = arith.extui %6 : i1 to i32
    %c0_i32_1 = arith.constant 0 : i32
    %8 = arith.cmpi ne, %7, %c0_i32_1 : i32
    scf.if %8 {
      %cst = arith.constant 0.000000e+00 : f32
      %9 = vector.broadcast %cst : f32 to vector<128x128xf32>
      %c0 = arith.constant 0 : index
      %c0_2 = arith.constant 0 : index
      %10 = vector.load %arg10[%c0, %c0_2] : memref<128x128xf32, #tpu.memory_space<vmem>>, vector<128x128xf32>
      tpu.vector_store %arg10[%c0, %c0_2], %9 {strides = array<i32>} : memref<128x128xf32, #tpu.memory_space<vmem>>, vector<128x128xf32>,
    } else {
    }
    return
  }
  func.func @transform_0(%arg0: i32, %arg1: i32) -> i32 {
    %c0_i32 = arith.constant 0 : i32
    %c0_i32_0 = arith.constant 0 : i32
    return %c0_i32 : i32
  }
  func.func @transform_1(%arg0: i32, %arg1: i32) -> (i32, i32) {
    %c0_i32 = arith.constant 0 : i32
    %c0_i32_0 = arith.constant 0 : i32
    return %arg0, %c0_i32 : i32, i32
  }
  func.func @transform_2(%arg0: i32, %arg1: i32) -> (i32, i32) {
    %c0_i32 = arith.constant 0 : i32
    %c0_i32_0 = arith.constant 0 : i32
    return %c0_i32, %arg1 : i32, i32
  }
  func.func @transform_3(%arg0: i32, %arg1: i32) -> (i32, i32) {
    %c0_i32 = arith.constant 0 : i32
    %c0_i32_0 = arith.constant 0 : i32
    return %arg0, %c0_i32 : i32, i32
  }
  func.func @transform_4(%arg0: i32, %arg1: i32) -> (i32, i32) {
    %c0_i32 = arith.constant 0 : i32
    %c0_i32_0 = arith.constant 0 : i32
    return %c0_i32, %arg1 : i32, i32
  }
  func.func @transform_5(%arg0: i32, %arg1: i32) -> (i32, i32) {
    %c0_i32 = arith.constant 0 : i32
    %c0_i32_0 = arith.constant 0 : i32
    return %arg0, %c0_i32 : i32, i32
  }
  func.func @transform_6(%arg0: i32, %arg1: i32) -> (i32, i32) {
    %c0_i32 = arith.constant 0 : i32
    %c0_i32_0 = arith.constant 0 : i32
    return %c0_i32, %arg1 : i32, i32
  }
  func.func @transform_7(%arg0: i32, %arg1: i32) -> (i32, i32) {
    %c0_i32 = arith.constant 0 : i32
    %c0_i32_0 = arith.constant 0 : i32
    return %arg0, %c0_i32 : i32, i32
  }
  func.func @transform_8(%arg0: i32, %arg1: i32) -> (i32, i32) {
    %c0_i32 = arith.constant 0 : i32
    return %arg0, %arg1 : i32, i32
  }
}

</mosaic_0001>

<llo_original>
// kernel: tpu_custom_call.1
$region0: #{tpu_custom_call.1}
  #allocation0 [shape = 'u32[]', space=smem, size = 0x4, offset = 0x4, fixed_abs, tag = 'smem constant byte address 0x4 - core index']
  #allocation1 [shape = 'u32[144,128]{1,0:T(1,128)}', space=vmem, size = 0x12000, scoped, tag = 'internal scratch']
  %s0 = inlined_call_operand.vmem [shape: f32[2], index: 0, kind: input, shape index: {}]
  %s1 = inlined_call_operand.vmem [shape: f32[128,8], index: 1, kind: input, shape index: {}]
  %s2 = inlined_call_operand.vmem [shape: f32[8,128], index: 2, kind: input, shape index: {}]
  %s3 = inlined_call_operand.vmem [shape: f32[128,1], index: 3, kind: input, shape index: {}]
  %s4 = inlined_call_operand.vmem [shape: f32[1,128], index: 4, kind: input, shape index: {}]
  %s5 = inlined_call_operand.vmem [shape: f32[128,8], index: 5, kind: input, shape index: {}]
  %s6 = inlined_call_operand.vmem [shape: f32[8,128], index: 6, kind: input, shape index: {}]
  %s7 = inlined_call_operand.vmem [shape: f32[128,1], index: 7, kind: input, shape index: {}]
  %s8 = inlined_call_operand.hbm [shape: f32[128,128], index: 8, kind: output, shape index: {}]
  %s9 = sld [smem:[#allocation0]]
  $region58: #{tpu_custom_call.1} parent=0
    _
  %s11 = ssub.s32 1, %s9
  %s12 = scalar_select 0, %s11, %s9
  $region1: #{tpu_custom_call.1} parent=0
    #allocation2 [shape = 'u8[512]{0}', space=smem, size = 0x200, scoped, tag = 'input window, operand 0, single buffered']
    #allocation3 [shape = 's32[1]{0}', space=sflag, size = 0x4, scoped, tag = 'scoped memory for tpu_custom_call.1']
    #allocation4 [shape = 's32[1]{0}', space=sflag, size = 0x4, scoped, tag = 'scoped memory for tpu_custom_call.1']
    #allocation5 [shape = 'u8[65536]{0}', space=vmem, size = 0x10000, scoped, tag = 'output window, operand 0, single buffered']
    %13 = vsyncpa [#allocation4], 0
    %14 = vsyncpa [#allocation3], 0
    // Predicated region
    $region2: #{tpu_custom_call.1} parent=1 // pred_check
      _
    $region3: #{tpu_custom_call.1} parent=1 // pred_check_branch
      %16 = sbr.rel (0) target = $region5
    $region4: #{tpu_custom_call.1} parent=1 // pred_region
      %s18 = ssub.s32 16, 16
      %19 = vsyncadd [#allocation4], %s18
      %s21 = sshll.u32 %s0, 4
      %s22 = int_to_ptr.vmem [resolvable:$true] %s21
      %24 = dma.vmem_to_smem %s22, 16, [#allocation2], [#allocation4]
    $region5: #{tpu_custom_call.1} parent=1 // pred_fallthru
      _
    // Predicated region
    $region6: #{tpu_custom_call.1} parent=1 // pred_check
      _
    $region7: #{tpu_custom_call.1} parent=1 // pred_check_branch
      %26 = sbr.rel (0) target = $region9
    $region8: #{tpu_custom_call.1} parent=1 // pred_region
      _
    $region9: #{tpu_custom_call.1} parent=1 // pred_fallthru
      _
    // Predicated region
    $region10: #{tpu_custom_call.1} parent=1 // pred_check
      _
    $region11: #{tpu_custom_call.1} parent=1 // pred_check_branch
      %28 = sbr.rel (0) target = $region13
    $region12: #{tpu_custom_call.1} parent=1 // pred_region
      _
    $region13: #{tpu_custom_call.1} parent=1 // pred_fallthru
      _
    // Predicated region
    $region14: #{tpu_custom_call.1} parent=1 // pred_check
      _
    $region15: #{tpu_custom_call.1} parent=1 // pred_check_branch
      %30 = sbr.rel (0) target = $region17
    $region16: #{tpu_custom_call.1} parent=1 // pred_region
      _
    $region17: #{tpu_custom_call.1} parent=1 // pred_fallthru
      _
    // Predicated region
    $region18: #{tpu_custom_call.1} parent=1 // pred_check
      _
    $region19: #{tpu_custom_call.1} parent=1 // pred_check_branch
      %32 = sbr.rel (0) target = $region21
    $region20: #{tpu_custom_call.1} parent=1 // pred_region
      _
    $region21: #{tpu_custom_call.1} parent=1 // pred_fallthru
      _
    // Predicated region
    $region22: #{tpu_custom_call.1} parent=1 // pred_check
      _
    $region23: #{tpu_custom_call.1} parent=1 // pred_check_branch
      %34 = sbr.rel (0) target = $region25
    $region24: #{tpu_custom_call.1} parent=1 // pred_region
      _
    $region25: #{tpu_custom_call.1} parent=1 // pred_fallthru
      _
    // Predicated region
    $region26: #{tpu_custom_call.1} parent=1 // pred_check
      _
    $region27: #{tpu_custom_call.1} parent=1 // pred_check_branch
      %36 = sbr.rel (0) target = $region29
    $region28: #{tpu_custom_call.1} parent=1 // pred_region
      _
    $region29: #{tpu_custom_call.1} parent=1 // pred_fallthru
      _
    // Predicated region
    $region30: #{tpu_custom_call.1} parent=1 // pred_check
      _
    $region31: #{tpu_custom_call.1} parent=1 // pred_check_branch
      %38 = sbr.rel (0) target = $region33
    $region32: #{tpu_custom_call.1} parent=1 // pred_region
      _
    $region33: #{tpu_custom_call.1} parent=1 // pred_fallthru
      _
    // Predicated region
    $region34: #{tpu_custom_call.1} parent=1 // pred_check
      _
    $region35: #{tpu_custom_call.1} parent=1 // pred_check_branch
      %40 = sbr.rel (0) target = $region37
    $region36: #{tpu_custom_call.1} parent=1 // pred_region
      %41 = dma.done [#allocation4], 16
    $region37: #{tpu_custom_call.1} parent=1 // pred_fallthru
      _
    %42 = sfence
    %p43 = scmp.ge.s32.totalorder 0, 0
    // Predicated region
    $region38: #{tpu_custom_call.1} parent=1 // pred_check
      %p44 = pneg %p43
    $region39: #{tpu_custom_call.1} parent=1 // pred_check_branch
      %46 = sbr.rel (%p44) target = $region41
    $region40: #{tpu_custom_call.1} parent=1 // pred_region
      %v47 = vld [vmem:[%s1] sm:$0xff]
      %v48 = vld [vmem:[%s1 + $0x8] sm:$0xff]
      %v49 = vld [vmem:[%s1 + $0x10] sm:$0xff]
      %v50 = vld [vmem:[%s1 + $0x18] sm:$0xff]
      %v51 = vld [vmem:[%s1 + $0x20] sm:$0xff]
      %v52 = vld [vmem:[%s1 + $0x28] sm:$0xff]
      %v53 = vld [vmem:[%s1 + $0x30] sm:$0xff]
      %v54 = vld [vmem:[%s1 + $0x38] sm:$0xff]
      %v55 = vld [vmem:[%s1 + $0x40] sm:$0xff]
      %v56 = vld [vmem:[%s1 + $0x48] sm:$0xff]
      %v57 = vld [vmem:[%s1 + $0x50] sm:$0xff]
      %v58 = vld [vmem:[%s1 + $0x58] sm:$0xff]
      %v59 = vld [vmem:[%s1 + $0x60] sm:$0xff]
      %v60 = vld [vmem:[%s1 + $0x68] sm:$0xff]
      %v61 = vld [vmem:[%s1 + $0x70] sm:$0xff]
      %v62 = vld [vmem:[%s1 + $0x78] sm:$0xff]
      %v63 = vld [vmem:[%s2] sm:$0xff]
      %v64 = vld [vmem:[%s3] sm:$0xff]
      %v65 = vld [vmem:[%s3 + $0x8] sm:$0xff]
      %v66 = vld [vmem:[%s3 + $0x10] sm:$0xff]
      %v67 = vld [vmem:[%s3 + $0x18] sm:$0xff]
      %v68 = vld [vmem:[%s3 + $0x20] sm:$0xff]
      %v69 = vld [vmem:[%s3 + $0x28] sm:$0xff]
      %v70 = vld [vmem:[%s3 + $0x30] sm:$0xff]
      %v71 = vld [vmem:[%s3 + $0x38] sm:$0xff]
      %v72 = vld [vmem:[%s3 + $0x40] sm:$0xff]
      %v73 = vld [vmem:[%s3 + $0x48] sm:$0xff]
      %v74 = vld [vmem:[%s3 + $0x50] sm:$0xff]
      %v75 = vld [vmem:[%s3 + $0x58] sm:$0xff]
      %v76 = vld [vmem:[%s3 + $0x60] sm:$0xff]
      %v77 = vld [vmem:[%s3 + $0x68] sm:$0xff]
      %v78 = vld [vmem:[%s3 + $0x70] sm:$0xff]
      %v79 = vld [vmem:[%s3 + $0x78] sm:$0xff]
      %v80 = vld [vmem:[%s4] sm:$0x1]
      %v81 = vld [vmem:[%s5] sm:$0xff]
      %v82 = vld [vmem:[%s5 + $0x8] sm:$0xff]
      %v83 = vld [vmem:[%s5 + $0x10] sm:$0xff]
      %v84 = vld [vmem:[%s5 + $0x18] sm:$0xff]
      %v85 = vld [vmem:[%s5 + $0x20] sm:$0xff]
      %v86 = vld [vmem:[%s5 + $0x28] sm:$0xff]
      %v87 = vld [vmem:[%s5 + $0x30] sm:$0xff]
      %v88 = vld [vmem:[%s5 + $0x38] sm:$0xff]
      %v89 = vld [vmem:[%s5 + $0x40] sm:$0xff]
      %v90 = vld [vmem:[%s5 + $0x48] sm:$0xff]
      %v91 = vld [vmem:[%s5 + $0x50] sm:$0xff]
      %v92 = vld [vmem:[%s5 + $0x58] sm:$0xff]
      %v93 = vld [vmem:[%s5 + $0x60] sm:$0xff]
      %v94 = vld [vmem:[%s5 + $0x68] sm:$0xff]
      %v95 = vld [vmem:[%s5 + $0x70] sm:$0xff]
      %v96 = vld [vmem:[%s5 + $0x78] sm:$0xff]
      %v97 = vld [vmem:[%s6] sm:$0xff]
      %s98 = sld [smem:[#allocation2]]
      %s99 = sld [smem:[#allocation2 + $0x1]]
      %v100 = vmul.f32 %v47, %v47
      %v101 = vmul.f32 %v48, %v48
      %v102 = vmul.f32 %v49, %v49
      %v103 = vmul.f32 %v50, %v50
      %v104 = vmul.f32 %v51, %v51
      %v105 = vmul.f32 %v52, %v52
      %v106 = vmul.f32 %v53, %v53
      %v107 = vmul.f32 %v54, %v54
      %v108 = vmul.f32 %v55, %v55
      %v109 = vmul.f32 %v56, %v56
      %v110 = vmul.f32 %v57, %v57
      %v111 = vmul.f32 %v58, %v58
      %v112 = vmul.f32 %v59, %v59
      %v113 = vmul.f32 %v60, %v60
      %v114 = vmul.f32 %v61, %v61
      %v115 = vmul.f32 %v62, %v62
      %vm116 = vcmask 64512
      %v117 = vsel %vm116, %v100, 0.0
      %118 = vadd.xlane.f32.xlu0 %v117
      %v119 = vpop.xlane.xlu0 %118
      %v120 = vsel %vm116, %v101, 0.0
      %121 = vadd.xlane.f32.xlu0 %v120
      %v122 = vpop.xlane.xlu0 %121
      %v123 = vsel %vm116, %v102, 0.0
      %124 = vadd.xlane.f32.xlu0 %v123
      %v125 = vpop.xlane.xlu0 %124
      %v126 = vsel %vm116, %v103, 0.0
      %127 = vadd.xlane.f32.xlu0 %v126
      %v128 = vpop.xlane.xlu0 %127
      %v129 = vsel %vm116, %v104, 0.0
      %130 = vadd.xlane.f32.xlu0 %v129
      %v131 = vpop.xlane.xlu0 %130
      %v132 = vsel %vm116, %v105, 0.0
      %133 = vadd.xlane.f32.xlu0 %v132
      %v134 = vpop.xlane.xlu0 %133
      %v135 = vsel %vm116, %v106, 0.0
      %136 = vadd.xlane.f32.xlu0 %v135
      %v137 = vpop.xlane.xlu0 %136
      %v138 = vsel %vm116, %v107, 0.0
      %139 = vadd.xlane.f32.xlu0 %v138
      %v140 = vpop.xlane.xlu0 %139
      %v141 = vsel %vm116, %v108, 0.0
      %142 = vadd.xlane.f32.xlu0 %v141
      %v143 = vpop.xlane.xlu0 %142
      %v144 = vsel %vm116, %v109, 0.0
      %145 = vadd.xlane.f32.xlu0 %v144
      %v146 = vpop.xlane.xlu0 %145
      %v147 = vsel %vm116, %v110, 0.0
      %148 = vadd.xlane.f32.xlu0 %v147
      %v149 = vpop.xlane.xlu0 %148
      %v150 = vsel %vm116, %v111, 0.0
      %151 = vadd.xlane.f32.xlu0 %v150
      %v152 = vpop.xlane.xlu0 %151
      %v153 = vsel %vm116, %v112, 0.0
      %154 = vadd.xlane.f32.xlu0 %v153
      %v155 = vpop.xlane.xlu0 %154
      %v156 = vsel %vm116, %v113, 0.0
      %157 = vadd.xlane.f32.xlu0 %v156
      %v158 = vpop.xlane.xlu0 %157
      %v159 = vsel %vm116, %v114, 0.0
      %160 = vadd.xlane.f32.xlu0 %v159
      %v161 = vpop.xlane.xlu0 %160
      %v162 = vsel %vm116, %v115, 0.0
      %163 = vadd.xlane.f32.xlu0 %v162
      %v164 = vpop.xlane.xlu0 %163
      %v165 = vmul.f32 %v63, %v63
      %v166 = vrot.slane %v165, 4
      %v167 = vadd.f32 %v165, %v166
      %v168 = vrot.slane %v167, 2
      %v169 = vadd.f32 %v167, %v168
      %v170 = vrot.slane %v169, 1
      %v171 = vadd.f32 %v169, %v170
      %v173 = vsel %vm116, %v47, 0
      %v176 = vsel %vm116, %v48, 0
      %v179 = vsel %vm116, %v49, 0
      %v182 = vsel %vm116, %v50, 0
      %v185 = vsel %vm116, %v51, 0
      %v188 = vsel %vm116, %v52, 0
      %v191 = vsel %vm116, %v53, 0
      %v194 = vsel %vm116, %v54, 0
      %v197 = vsel %vm116, %v55, 0
      %v200 = vsel %vm116, %v56, 0
      %v203 = vsel %vm116, %v57, 0
      %v206 = vsel %vm116, %v58, 0
      %v209 = vsel %vm116, %v59, 0
      %v212 = vsel %vm116, %v60, 0
      %v215 = vsel %vm116, %v61, 0
      %v218 = vsel %vm116, %v62, 0
      %220 = vmatprep.subr.mxu0 0.0
      %221 = vmatpush1.msra.mxu0 0.0
      %222 = vmatprep.subr.mxu0 0.0
      %223 = vmatpush1.msra.mxu0 0.0
      %224 = vmatprep.subr.mxu0 0.0
      %225 = vmatpush1.msra.mxu0 0.0
      %226 = vmatprep.subr.mxu0 0.0
      %227 = vmatpush1.msra.mxu0 0.0
      %228 = vmatprep.subr.mxu0 0.0
      %229 = vmatpush1.msra.mxu0 0.0
      %230 = vmatprep.subr.mxu0 0.0
      %231 = vmatpush1.msra.mxu0 0.0
      %232 = vmatprep.subr.mxu0 0.0
      %233 = vmatpush1.msra.mxu0 0.0
      %234 = vmatprep.subr.mxu0 0.0
      %235 = vmatpush1.msra.mxu0 0.0
      %236 = vmatprep.subr.mxu0 0.0
      %237 = vmatpush1.msra.mxu0 0.0
      %238 = vmatprep.subr.mxu0 0.0
      %239 = vmatpush1.msra.mxu0 0.0
      %240 = vmatprep.subr.mxu0 0.0
      %241 = vmatpush1.msra.mxu0 0.0
      %242 = vmatprep.subr.mxu0 0.0
      %243 = vmatpush1.msra.mxu0 0.0
      %244 = vmatprep.subr.mxu0 0.0
      %245 = vmatpush1.msra.mxu0 0.0
      %246 = vmatprep.subr.mxu0 0.0
      %247 = vmatpush1.msra.mxu0 0.0
      %248 = vmatprep.subr.mxu0 0.0
      %249 = vmatpush1.msra.mxu0 0.0
      %250 = vmatprep.subr.mxu0 0.0
      %251 = vmatpush1.msra.mxu0 %v63
      %252 = vmatprep.subr.mxu0 0.0
      %253 = vmatpush2.msra.mxu0 0.0
      %254 = vmatprep.subr.mxu0 0.0
      %255 = vmatpush2.msra.mxu0 0.0
      %256 = vmatprep.subr.mxu0 0.0
      %257 = vmatpush2.msra.mxu0 0.0
      %258 = vmatprep.subr.mxu0 0.0
      %259 = vmatpush2.msra.mxu0 0.0
      %260 = vmatprep.subr.mxu0 0.0
      %261 = vmatpush2.msra.mxu0 0.0
      %262 = vmatprep.subr.mxu0 0.0
      %263 = vmatpush2.msra.mxu0 0.0
      %264 = vmatprep.subr.mxu0 0.0
      %265 = vmatpush2.msra.mxu0 0.0
      %266 = vmatprep.subr.mxu0 0.0
      %267 = vmatpush2.msra.mxu0 0.0
      %268 = vmatprep.subr.mxu0 0.0
      %269 = vmatpush2.msra.mxu0 0.0
      %270 = vmatprep.subr.mxu0 0.0
      %271 = vmatpush2.msra.mxu0 0.0
      %272 = vmatprep.subr.mxu0 0.0
      %273 = vmatpush2.msra.mxu0 0.0
      %274 = vmatprep.subr.mxu0 0.0
      %275 = vmatpush2.msra.mxu0 0.0
      %276 = vmatprep.subr.mxu0 0.0
      %277 = vmatpush2.msra.mxu0 0.0
      %278 = vmatprep.subr.mxu0 0.0
      %279 = vmatpush2.msra.mxu0 0.0
      %280 = vmatprep.subr.mxu0 0.0
      %281 = vmatpush2.msra.mxu0 0.0
      %282 = vmatprep.subr.mxu0 0.0
      %283 = vmatpush2.msra.mxu0 0.0
      %284 = vmatprep.mubr.f32.mxu0 0.0
      %285 = vmatmul.mubr.f32.gmra.mxu0 %v173
      %v286 = vpop.f32.mrf.mxu0
      %v287 = vadd.f32 0.0, %v286
      %v288 = vpop.f32.mrf.mxu0
      %289 = vmatprep.mubr.f32.mxu0 0.0
      %290 = vmatmul.mubr.f32.gmra.mxu0 %v176
      %v291 = vpop.f32.mrf.mxu0
      %v292 = vadd.f32 0.0, %v291
      %v293 = vpop.f32.mrf.mxu0
      %294 = vmatprep.mubr.f32.mxu0 0.0
      %295 = vmatmul.mubr.f32.gmra.mxu0 %v179
      %v296 = vpop.f32.mrf.mxu0
      %v297 = vadd.f32 0.0, %v296
      %v298 = vpop.f32.mrf.mxu0
      %299 = vmatprep.mubr.f32.mxu0 0.0
      %300 = vmatmul.mubr.f32.gmra.mxu0 %v182
      %v301 = vpop.f32.mrf.mxu0
      %v302 = vadd.f32 0.0, %v301
      %v303 = vpop.f32.mrf.mxu0
      %304 = vmatprep.mubr.f32.mxu0 0.0
      %305 = vmatmul.mubr.f32.gmra.mxu0 %v185
      %v306 = vpop.f32.mrf.mxu0
      %v307 = vadd.f32 0.0, %v306
      %v308 = vpop.f32.mrf.mxu0
      %309 = vmatprep.mubr.f32.mxu0 0.0
      %310 = vmatmul.mubr.f32.gmra.mxu0 %v188
      %v311 = vpop.f32.mrf.mxu0
      %v312 = vadd.f32 0.0, %v311
      %v313 = vpop.f32.mrf.mxu0
      %314 = vmatprep.mubr.f32.mxu0 0.0
      %315 = vmatmul.mubr.f32.gmra.mxu0 %v191
      %v316 = vpop.f32.mrf.mxu0
      %v317 = vadd.f32 0.0, %v316
      %v318 = vpop.f32.mrf.mxu0
      %319 = vmatprep.mubr.f32.mxu0 0.0
      %320 = vmatmul.mubr.f32.gmra.mxu0 %v194
      %v321 = vpop.f32.mrf.mxu0
      %v322 = vadd.f32 0.0, %v321
      %v323 = vpop.f32.mrf.mxu0
      %324 = vmatprep.mubr.f32.mxu0 0.0
      %325 = vmatmul.mubr.f32.gmra.mxu0 %v197
      %v326 = vpop.f32.mrf.mxu0
      %v327 = vadd.f32 0.0, %v326
      %v328 = vpop.f32.mrf.mxu0
      %329 = vmatprep.mubr.f32.mxu0 0.0
      %330 = vmatmul.mubr.f32.gmra.mxu0 %v200
      %v331 = vpop.f32.mrf.mxu0
      %v332 = vadd.f32 0.0, %v331
      %v333 = vpop.f32.mrf.mxu0
      %334 = vmatprep.mubr.f32.mxu0 0.0
      %335 = vmatmul.mubr.f32.gmra.mxu0 %v203
      %v336 = vpop.f32.mrf.mxu0
      %v337 = vadd.f32 0.0, %v336
      %v338 = vpop.f32.mrf.mxu0
      %339 = vmatprep.mubr.f32.mxu0 0.0
      %340 = vmatmul.mubr.f32.gmra.mxu0 %v206
      %v341 = vpop.f32.mrf.mxu0
      %v342 = vadd.f32 0.0, %v341
      %v343 = vpop.f32.mrf.mxu0
      %344 = vmatprep.mubr.f32.mxu0 0.0
      %345 = vmatmul.mubr.f32.gmra.mxu0 %v209
      %v346 = vpop.f32.mrf.mxu0
      %v347 = vadd.f32 0.0, %v346
      %v348 = vpop.f32.mrf.mxu0
      %349 = vmatprep.mubr.f32.mxu0 0.0
      %350 = vmatmul.mubr.f32.gmra.mxu0 %v212
      %v351 = vpop.f32.mrf.mxu0
      %v352 = vadd.f32 0.0, %v351
      %v353 = vpop.f32.mrf.mxu0
      %354 = vmatprep.mubr.f32.mxu0 0.0
      %355 = vmatmul.mubr.f32.gmra.mxu0 %v215
      %v356 = vpop.f32.mrf.mxu0
      %v357 = vadd.f32 0.0, %v356
      %v358 = vpop.f32.mrf.mxu0
      %359 = vmatprep.mubr.f32.mxu0 0.0
      %360 = vmatmul.mubr.f32.gmra.mxu0 %v218
      %v361 = vpop.f32.mrf.mxu0
      %v362 = vadd.f32 0.0, %v361
      %v363 = vpop.f32.mrf.mxu0
      %364 = vdwg.mxu0
      %v365 = vadd.f32 %v119, %v171
      %v366 = vadd.f32 %v122, %v171
      %v367 = vadd.f32 %v125, %v171
      %v368 = vadd.f32 %v128, %v171
      %v369 = vadd.f32 %v131, %v171
      %v370 = vadd.f32 %v134, %v171
      %v371 = vadd.f32 %v137, %v171
      %v372 = vadd.f32 %v140, %v171
      %v373 = vadd.f32 %v143, %v171
      %v374 = vadd.f32 %v146, %v171
      %v375 = vadd.f32 %v149, %v171
      %v376 = vadd.f32 %v152, %v171
      %v377 = vadd.f32 %v155, %v171
      %v378 = vadd.f32 %v158, %v171
      %v379 = vadd.f32 %v161, %v171
      %v380 = vadd.f32 %v164, %v171
      %v381 = vmul.f32 %v287, 2.0
      %v382 = vmul.f32 %v292, 2.0
      %v383 = vmul.f32 %v297, 2.0
      %v384 = vmul.f32 %v302, 2.0
      %v385 = vmul.f32 %v307, 2.0
      %v386 = vmul.f32 %v312, 2.0
      %v387 = vmul.f32 %v317, 2.0
      %v388 = vmul.f32 %v322, 2.0
      %v389 = vmul.f32 %v327, 2.0
      %v390 = vmul.f32 %v332, 2.0
      %v391 = vmul.f32 %v337, 2.0
      %v392 = vmul.f32 %v342, 2.0
      %v393 = vmul.f32 %v347, 2.0
      %v394 = vmul.f32 %v352, 2.0
      %v395 = vmul.f32 %v357, 2.0
      %v396 = vmul.f32 %v362, 2.0
      %v397 = vsub.f32 %v365, %v381
      %v398 = vsub.f32 %v366, %v382
      %v399 = vsub.f32 %v367, %v383
      %v400 = vsub.f32 %v368, %v384
      %v401 = vsub.f32 %v369, %v385
      %v402 = vsub.f32 %v370, %v386
      %v403 = vsub.f32 %v371, %v387
      %v404 = vsub.f32 %v372, %v388
      %v405 = vsub.f32 %v373, %v389
      %v406 = vsub.f32 %v374, %v390
      %v407 = vsub.f32 %v375, %v391
      %v408 = vsub.f32 %v376, %v392
      %v409 = vsub.f32 %v377, %v393
      %v410 = vsub.f32 %v378, %v394
      %v411 = vsub.f32 %v379, %v395
      %v412 = vsub.f32 %v380, %v396
      %v413 = vmax.f32 %v397, 0.0
      %v414 = vmax.f32 %v398, 0.0
      %v415 = vmax.f32 %v399, 0.0
      %v416 = vmax.f32 %v400, 0.0
      %v417 = vmax.f32 %v401, 0.0
      %v418 = vmax.f32 %v402, 0.0
      %v419 = vmax.f32 %v403, 0.0
      %v420 = vmax.f32 %v404, 0.0
      %v421 = vmax.f32 %v405, 0.0
      %v422 = vmax.f32 %v406, 0.0
      %v423 = vmax.f32 %v407, 0.0
      %v424 = vmax.f32 %v408, 0.0
      %v425 = vmax.f32 %v409, 0.0
      %v426 = vmax.f32 %v410, 0.0
      %v427 = vmax.f32 %v411, 0.0
      %v428 = vmax.f32 %v412, 0.0
      %430 = vset.pattern.permute.xlu0 0
      %431 = vperm.xlu0 %430, %v64
      %v432 = vpop.permute.xlu0 %431
      %435 = vset.pattern.permute.xlu0 0
      %436 = vperm.xlu0 %435, %v65
      %v437 = vpop.permute.xlu0 %436
      %440 = vset.pattern.permute.xlu0 0
      %441 = vperm.xlu0 %440, %v66
      %v442 = vpop.permute.xlu0 %441
      %445 = vset.pattern.permute.xlu0 0
      %446 = vperm.xlu0 %445, %v67
      %v447 = vpop.permute.xlu0 %446
      %450 = vset.pattern.permute.xlu0 0
      %451 = vperm.xlu0 %450, %v68
      %v452 = vpop.permute.xlu0 %451
      %455 = vset.pattern.permute.xlu0 0
      %456 = vperm.xlu0 %455, %v69
      %v457 = vpop.permute.xlu0 %456
      %460 = vset.pattern.permute.xlu0 0
      %461 = vperm.xlu0 %460, %v70
      %v462 = vpop.permute.xlu0 %461
      %465 = vset.pattern.permute.xlu0 0
      %466 = vperm.xlu0 %465, %v71
      %v467 = vpop.permute.xlu0 %466
      %470 = vset.pattern.permute.xlu0 0
      %471 = vperm.xlu0 %470, %v72
      %v472 = vpop.permute.xlu0 %471
      %475 = vset.pattern.permute.xlu0 0
      %476 = vperm.xlu0 %475, %v73
      %v477 = vpop.permute.xlu0 %476
      %480 = vset.pattern.permute.xlu0 0
      %481 = vperm.xlu0 %480, %v74
      %v482 = vpop.permute.xlu0 %481
      %485 = vset.pattern.permute.xlu0 0
      %486 = vperm.xlu0 %485, %v75
      %v487 = vpop.permute.xlu0 %486
      %490 = vset.pattern.permute.xlu0 0
      %491 = vperm.xlu0 %490, %v76
      %v492 = vpop.permute.xlu0 %491
      %495 = vset.pattern.permute.xlu0 0
      %496 = vperm.xlu0 %495, %v77
      %v497 = vpop.permute.xlu0 %496
      %500 = vset.pattern.permute.xlu0 0
      %501 = vperm.xlu0 %500, %v78
      %v502 = vpop.permute.xlu0 %501
      %505 = vset.pattern.permute.xlu0 0
      %506 = vperm.xlu0 %505, %v79
      %v507 = vpop.permute.xlu0 %506
      %v510 = vlaneseq
      %v511 = vshrl.u32 %v510, 7
      %v512 = vsub.s32 0, %v511
      %v513 = vrot.slane %v80, %v512
      %v515 = vsub.f32 %v432, %v513
      %v516 = vsub.f32 %v437, %v513
      %v517 = vsub.f32 %v442, %v513
      %v518 = vsub.f32 %v447, %v513
      %v519 = vsub.f32 %v452, %v513
      %v520 = vsub.f32 %v457, %v513
      %v521 = vsub.f32 %v462, %v513
      %v522 = vsub.f32 %v467, %v513
      %v523 = vsub.f32 %v472, %v513
      %v524 = vsub.f32 %v477, %v513
      %v525 = vsub.f32 %v482, %v513
      %v526 = vsub.f32 %v487, %v513
      %v527 = vsub.f32 %v492, %v513
      %v528 = vsub.f32 %v497, %v513
      %v529 = vsub.f32 %v502, %v513
      %v530 = vsub.f32 %v507, %v513
      %v531 = vstv %s98
      %v532 = vmul.f32 %v413, %v531
      %v533 = vmul.f32 %v414, %v531
      %v534 = vmul.f32 %v415, %v531
      %v535 = vmul.f32 %v416, %v531
      %v536 = vmul.f32 %v417, %v531
      %v537 = vmul.f32 %v418, %v531
      %v538 = vmul.f32 %v419, %v531
      %v539 = vmul.f32 %v420, %v531
      %v540 = vmul.f32 %v421, %v531
      %v541 = vmul.f32 %v422, %v531
      %v542 = vmul.f32 %v423, %v531
      %v543 = vmul.f32 %v424, %v531
      %v544 = vmul.f32 %v425, %v531
      %v545 = vmul.f32 %v426, %v531
      %v546 = vmul.f32 %v427, %v531
      %v547 = vmul.f32 %v428, %v531
      %v548 = vmul.f32 %v515, %v515
      %v549 = vmul.f32 %v516, %v516
      %v550 = vmul.f32 %v517, %v517
      %v551 = vmul.f32 %v518, %v518
      %v552 = vmul.f32 %v519, %v519
      %v553 = vmul.f32 %v520, %v520
      %v554 = vmul.f32 %v521, %v521
      %v555 = vmul.f32 %v522, %v522
      %v556 = vmul.f32 %v523, %v523
      %v557 = vmul.f32 %v524, %v524
      %v558 = vmul.f32 %v525, %v525
      %v559 = vmul.f32 %v526, %v526
      %v560 = vmul.f32 %v527, %v527
      %v561 = vmul.f32 %v528, %v528
      %v562 = vmul.f32 %v529, %v529
      %v563 = vmul.f32 %v530, %v530
      %v564 = vstv %s99
      %v565 = vmul.f32 %v548, %v564
      %v566 = vmul.f32 %v549, %v564
      %v567 = vmul.f32 %v550, %v564
      %v568 = vmul.f32 %v551, %v564
      %v569 = vmul.f32 %v552, %v564
      %v570 = vmul.f32 %v553, %v564
      %v571 = vmul.f32 %v554, %v564
      %v572 = vmul.f32 %v555, %v564
      %v573 = vmul.f32 %v556, %v564
      %v574 = vmul.f32 %v557, %v564
      %v575 = vmul.f32 %v558, %v564
      %v576 = vmul.f32 %v559, %v564
      %v577 = vmul.f32 %v560, %v564
      %v578 = vmul.f32 %v561, %v564
      %v579 = vmul.f32 %v562, %v564
      %v580 = vmul.f32 %v563, %v564
      %v581 = vadd.f32 %v532, %v565
      %v582 = vadd.f32 %v533, %v566
      %v583 = vadd.f32 %v534, %v567
      %v584 = vadd.f32 %v535, %v568
      %v585 = vadd.f32 %v536, %v569
      %v586 = vadd.f32 %v537, %v570
      %v587 = vadd.f32 %v538, %v571
      %v588 = vadd.f32 %v539, %v572
      %v589 = vadd.f32 %v540, %v573
      %v590 = vadd.f32 %v541, %v574
      %v591 = vadd.f32 %v542, %v575
      %v592 = vadd.f32 %v543, %v576
      %v593 = vadd.f32 %v544, %v577
      %v594 = vadd.f32 %v545, %v578
      %v595 = vadd.f32 %v546, %v579
      %v596 = vadd.f32 %v547, %v580
      %v597 = vsub.f32 0.0, %v581
      %v598 = vsub.f32 0.0, %v582
      %v599 = vsub.f32 0.0, %v583
      %v600 = vsub.f32 0.0, %v584
      %v601 = vsub.f32 0.0, %v585
      %v602 = vsub.f32 0.0, %v586
      %v603 = vsub.f32 0.0, %v587
      %v604 = vsub.f32 0.0, %v588
      %v605 = vsub.f32 0.0, %v589
      %v606 = vsub.f32 0.0, %v590
      %v607 = vsub.f32 0.0, %v591
      %v608 = vsub.f32 0.0, %v592
      %v609 = vsub.f32 0.0, %v593
      %v610 = vsub.f32 0.0, %v594
      %v611 = vsub.f32 0.0, %v595
      %v612 = vsub.f32 0.0, %v596
      %v613 = vmul.f32 %v597, 1.442695
      %v614 = vpow.pop %v613
      %v615 = vmul.f32 %v598, 1.442695
      %v616 = vpow.pop %v615
      %v617 = vmul.f32 %v599, 1.442695
      %v618 = vpow.pop %v617
      %v619 = vmul.f32 %v600, 1.442695
      %v620 = vpow.pop %v619
      %v621 = vmul.f32 %v601, 1.442695
      %v622 = vpow.pop %v621
      %v623 = vmul.f32 %v602, 1.442695
      %v624 = vpow.pop %v623
      %v625 = vmul.f32 %v603, 1.442695
      %v626 = vpow.pop %v625
      %v627 = vmul.f32 %v604, 1.442695
      %v628 = vpow.pop %v627
      %v629 = vmul.f32 %v605, 1.442695
      %v630 = vpow.pop %v629
      %v631 = vmul.f32 %v606, 1.442695
      %v632 = vpow.pop %v631
      %v633 = vmul.f32 %v607, 1.442695
      %v634 = vpow.pop %v633
      %v635 = vmul.f32 %v608, 1.442695
      %v636 = vpow.pop %v635
      %v637 = vmul.f32 %v609, 1.442695
      %v638 = vpow.pop %v637
      %v639 = vmul.f32 %v610, 1.442695
      %v640 = vpow.pop %v639
      %v641 = vmul.f32 %v611, 1.442695
      %v642 = vpow.pop %v641
      %v643 = vmul.f32 %v612, 1.442695
      %v644 = vpow.pop %v643
      %v646 = vsel %vm116, %v81, 0
      %v649 = vsel %vm116, %v82, 0
      %v652 = vsel %vm116, %v83, 0
      %v655 = vsel %vm116, %v84, 0
      %v658 = vsel %vm116, %v85, 0
      %v661 = vsel %vm116, %v86, 0
      %v664 = vsel %vm116, %v87, 0
      %v667 = vsel %vm116, %v88, 0
      %v670 = vsel %vm116, %v89, 0
      %v673 = vsel %vm116, %v90, 0
      %v676 = vsel %vm116, %v91, 0
      %v679 = vsel %vm116, %v92, 0
      %v682 = vsel %vm116, %v93, 0
      %v685 = vsel %vm116, %v94, 0
      %v688 = vsel %vm116, %v95, 0
      %v691 = vsel %vm116, %v96, 0
      %693 = vmatprep.subr.mxu0 0.0
      %694 = vmatpush1.msra.mxu0 0.0
      %695 = vmatprep.subr.mxu0 0.0
      %696 = vmatpush1.msra.mxu0 0.0
      %697 = vmatprep.subr.mxu0 0.0
      %698 = vmatpush1.msra.mxu0 0.0
      %699 = vmatprep.subr.mxu0 0.0
      %700 = vmatpush1.msra.mxu0 0.0
      %701 = vmatprep.subr.mxu0 0.0
      %702 = vmatpush1.msra.mxu0 0.0
      %703 = vmatprep.subr.mxu0 0.0
      %704 = vmatpush1.msra.mxu0 0.0
      %705 = vmatprep.subr.mxu0 0.0
      %706 = vmatpush1.msra.mxu0 0.0
      %707 = vmatprep.subr.mxu0 0.0
      %708 = vmatpush1.msra.mxu0 0.0
      %709 = vmatprep.subr.mxu0 0.0
      %710 = vmatpush1.msra.mxu0 0.0
      %711 = vmatprep.subr.mxu0 0.0
      %712 = vmatpush1.msra.mxu0 0.0
      %713 = vmatprep.subr.mxu0 0.0
      %714 = vmatpush1.msra.mxu0 0.0
      %715 = vmatprep.subr.mxu0 0.0
      %716 = vmatpush1.msra.mxu0 0.0
      %717 = vmatprep.subr.mxu0 0.0
      %718 = vmatpush1.msra.mxu0 0.0
      %719 = vmatprep.subr.mxu0 0.0
      %720 = vmatpush1.msra.mxu0 0.0
      %721 = vmatprep.subr.mxu0 0.0
      %722 = vmatpush1.msra.mxu0 0.0
      %723 = vmatprep.subr.mxu0 0.0
      %724 = vmatpush1.msra.mxu0 %v97
      %725 = vmatprep.subr.mxu0 0.0
      %726 = vmatpush2.msra.mxu0 0.0
      %727 = vmatprep.subr.mxu0 0.0
      %728 = vmatpush2.msra.mxu0 0.0
      %729 = vmatprep.subr.mxu0 0.0
      %730 = vmatpush2.msra.mxu0 0.0
      %731 = vmatprep.subr.mxu0 0.0
      %732 = vmatpush2.msra.mxu0 0.0
      %733 = vmatprep.subr.mxu0 0.0
      %734 = vmatpush2.msra.mxu0 0.0
      %735 = vmatprep.subr.mxu0 0.0
      %736 = vmatpush2.msra.mxu0 0.0
      %737 = vmatprep.subr.mxu0 0.0
      %738 = vmatpush2.msra.mxu0 0.0
      %739 = vmatprep.subr.mxu0 0.0
      %740 = vmatpush2.msra.mxu0 0.0
      %741 = vmatprep.subr.mxu0 0.0
      %742 = vmatpush2.msra.mxu0 0.0
      %743 = vmatprep.subr.mxu0 0.0
      %744 = vmatpush2.msra.mxu0 0.0
      %745 = vmatprep.subr.mxu0 0.0
      %746 = vmatpush2.msra.mxu0 0.0
      %747 = vmatprep.subr.mxu0 0.0
      %748 = vmatpush2.msra.mxu0 0.0
      %749 = vmatprep.subr.mxu0 0.0
      %750 = vmatpush2.msra.mxu0 0.0
      %751 = vmatprep.subr.mxu0 0.0
      %752 = vmatpush2.msra.mxu0 0.0
      %753 = vmatprep.subr.mxu0 0.0
      %754 = vmatpush2.msra.mxu0 0.0
      %755 = vmatprep.subr.mxu0 0.0
      %756 = vmatpush2.msra.mxu0 0.0
      %757 = vmatprep.mubr.f32.mxu0 0.0
      %758 = vmatmul.mubr.f32.gmra.mxu0 %v646
      %v759 = vpop.f32.mrf.mxu0
      %v760 = vadd.f32 0.0, %v759
      %v761 = vpop.f32.mrf.mxu0
      %762 = vmatprep.mubr.f32.mxu0 0.0
      %763 = vmatmul.mubr.f32.gmra.mxu0 %v649
      %v764 = vpop.f32.mrf.mxu0
      %v765 = vadd.f32 0.0, %v764
      %v766 = vpop.f32.mrf.mxu0
      %767 = vmatprep.mubr.f32.mxu0 0.0
      %768 = vmatmul.mubr.f32.gmra.mxu0 %v652
      %v769 = vpop.f32.mrf.mxu0
      %v770 = vadd.f32 0.0, %v769
      %v771 = vpop.f32.mrf.mxu0
      %772 = vmatprep.mubr.f32.mxu0 0.0
      %773 = vmatmul.mubr.f32.gmra.mxu0 %v655
      %v774 = vpop.f32.mrf.mxu0
      %v775 = vadd.f32 0.0, %v774
      %v776 = vpop.f32.mrf.mxu0
      %777 = vmatprep.mubr.f32.mxu0 0.0
      %778 = vmatmul.mubr.f32.gmra.mxu0 %v658
      %v779 = vpop.f32.mrf.mxu0
      %v780 = vadd.f32 0.0, %v779
      %v781 = vpop.f32.mrf.mxu0
      %782 = vmatprep.mubr.f32.mxu0 0.0
      %783 = vmatmul.mubr.f32.gmra.mxu0 %v661
      %v784 = vpop.f32.mrf.mxu0
      %v785 = vadd.f32 0.0, %v784
      %v786 = vpop.f32.mrf.mxu0
      %787 = vmatprep.mubr.f32.mxu0 0.0
      %788 = vmatmul.mubr.f32.gmra.mxu0 %v664
      %v789 = vpop.f32.mrf.mxu0
      %v790 = vadd.f32 0.0, %v789
      %v791 = vpop.f32.mrf.mxu0
      %792 = vmatprep.mubr.f32.mxu0 0.0
      %793 = vmatmul.mubr.f32.gmra.mxu0 %v667
      %v794 = vpop.f32.mrf.mxu0
      %v795 = vadd.f32 0.0, %v794
      %v796 = vpop.f32.mrf.mxu0
      %797 = vmatprep.mubr.f32.mxu0 0.0
      %798 = vmatmul.mubr.f32.gmra.mxu0 %v670
      %v799 = vpop.f32.mrf.mxu0
      %v800 = vadd.f32 0.0, %v799
      %v801 = vpop.f32.mrf.mxu0
      %802 = vmatprep.mubr.f32.mxu0 0.0
      %803 = vmatmul.mubr.f32.gmra.mxu0 %v673
      %v804 = vpop.f32.mrf.mxu0
      %v805 = vadd.f32 0.0, %v804
      %v806 = vpop.f32.mrf.mxu0
      %807 = vmatprep.mubr.f32.mxu0 0.0
      %808 = vmatmul.mubr.f32.gmra.mxu0 %v676
      %v809 = vpop.f32.mrf.mxu0
      %v810 = vadd.f32 0.0, %v809
      %v811 = vpop.f32.mrf.mxu0
      %812 = vmatprep.mubr.f32.mxu0 0.0
      %813 = vmatmul.mubr.f32.gmra.mxu0 %v679
      %v814 = vpop.f32.mrf.mxu0
      %v815 = vadd.f32 0.0, %v814
      %v816 = vpop.f32.mrf.mxu0
      %817 = vmatprep.mubr.f32.mxu0 0.0
      %818 = vmatmul.mubr.f32.gmra.mxu0 %v682
      %v819 = vpop.f32.mrf.mxu0
      %v820 = vadd.f32 0.0, %v819
      %v821 = vpop.f32.mrf.mxu0
      %822 = vmatprep.mubr.f32.mxu0 0.0
      %823 = vmatmul.mubr.f32.gmra.mxu0 %v685
      %v824 = vpop.f32.mrf.mxu0
      %v825 = vadd.f32 0.0, %v824
      %v826 = vpop.f32.mrf.mxu0
      %827 = vmatprep.mubr.f32.mxu0 0.0
      %828 = vmatmul.mubr.f32.gmra.mxu0 %v688
      %v829 = vpop.f32.mrf.mxu0
      %v830 = vadd.f32 0.0, %v829
      %v831 = vpop.f32.mrf.mxu0
      %832 = vmatprep.mubr.f32.mxu0 0.0
      %833 = vmatmul.mubr.f32.gmra.mxu0 %v691
      %v834 = vpop.f32.mrf.mxu0
      %v835 = vadd.f32 0.0, %v834
      %v836 = vpop.f32.mrf.mxu0
      %837 = vdwg.mxu0
      %v838 = vmul.f32 %v614, %v760
      %v839 = vmul.f32 %v616, %v765
      %v840 = vmul.f32 %v618, %v770
      %v841 = vmul.f32 %v620, %v775
      %v842 = vmul.f32 %v622, %v780
      %v843 = vmul.f32 %v624, %v785
      %v844 = vmul.f32 %v626, %v790
      %v845 = vmul.f32 %v628, %v795
      %v846 = vmul.f32 %v630, %v800
      %v847 = vmul.f32 %v632, %v805
      %v848 = vmul.f32 %v634, %v810
      %v849 = vmul.f32 %v636, %v815
      %v850 = vmul.f32 %v638, %v820
      %v851 = vmul.f32 %v640, %v825
      %v852 = vmul.f32 %v642, %v830
      %v853 = vmul.f32 %v644, %v835
      %854 = vst [vmem:[#allocation5] sm:$0xff] %v838
      %855 = vst [vmem:[#allocation5 + $0x8] sm:$0xff] %v839
      %856 = vst [vmem:[#allocation5 + $0x10] sm:$0xff] %v840
      %857 = vst [vmem:[#allocation5 + $0x18] sm:$0xff] %v841
      %858 = vst [vmem:[#allocation5 + $0x20] sm:$0xff] %v842
      %859 = vst [vmem:[#allocation5 + $0x28] sm:$0xff] %v843
      %860 = vst [vmem:[#allocation5 + $0x30] sm:$0xff] %v844
      %861 = vst [vmem:[#allocation5 + $0x38] sm:$0xff] %v845
      %862 = vst [vmem:[#allocation5 + $0x40] sm:$0xff] %v846
      %863 = vst [vmem:[#allocation5 + $0x48] sm:$0xff] %v847
      %864 = vst [vmem:[#allocation5 + $0x50] sm:$0xff] %v848
      %865 = vst [vmem:[#allocation5 + $0x58] sm:$0xff] %v849
      %866 = vst [vmem:[#allocation5 + $0x60] sm:$0xff] %v850
      %867 = vst [vmem:[#allocation5 + $0x68] sm:$0xff] %v851
      %868 = vst [vmem:[#allocation5 + $0x70] sm:$0xff] %v852
      %869 = vst [vmem:[#allocation5 + $0x78] sm:$0xff] %v853
    $region41: #{tpu_custom_call.1} parent=1 // pred_fallthru
      _
    %p870 = scmp.eq.s32.totalorder 0, 0
    // Predicated region
    $region42: #{tpu_custom_call.1} parent=1 // pred_check
      %p871 = pneg %p870
    $region43: #{tpu_custom_call.1} parent=1 // pred_check_branch
      %873 = sbr.rel (%p871) target = $region45
    $region44: #{tpu_custom_call.1} parent=1 // pred_region
      %v874 = vld [vmem:[#allocation5] sm:$0xff]
      %v875 = vld [vmem:[#allocation5 + $0x8] sm:$0xff]
      %v876 = vld [vmem:[#allocation5 + $0x10] sm:$0xff]
      %v877 = vld [vmem:[#allocation5 + $0x18] sm:$0xff]
      %v878 = vld [vmem:[#allocation5 + $0x20] sm:$0xff]
      %v879 = vld [vmem:[#allocation5 + $0x28] sm:$0xff]
      %v880 = vld [vmem:[#allocation5 + $0x30] sm:$0xff]
      %v881 = vld [vmem:[#allocation5 + $0x38] sm:$0xff]
      %v882 = vld [vmem:[#allocation5 + $0x40] sm:$0xff]
      %v883 = vld [vmem:[#allocation5 + $0x48] sm:$0xff]
      %v884 = vld [vmem:[#allocation5 + $0x50] sm:$0xff]
      %v885 = vld [vmem:[#allocation5 + $0x58] sm:$0xff]
      %v886 = vld [vmem:[#allocation5 + $0x60] sm:$0xff]
      %v887 = vld [vmem:[#allocation5 + $0x68] sm:$0xff]
      %v888 = vld [vmem:[#allocation5 + $0x70] sm:$0xff]
      %v889 = vld [vmem:[#allocation5 + $0x78] sm:$0xff]
      %v890 = vld [vmem:[%s7] sm:$0xff]
      %v891 = vld [vmem:[%s7 + $0x8] sm:$0xff]
      %v892 = vld [vmem:[%s7 + $0x10] sm:$0xff]
      %v893 = vld [vmem:[%s7 + $0x18] sm:$0xff]
      %v894 = vld [vmem:[%s7 + $0x20] sm:$0xff]
      %v895 = vld [vmem:[%s7 + $0x28] sm:$0xff]
      %v896 = vld [vmem:[%s7 + $0x30] sm:$0xff]
      %v897 = vld [vmem:[%s7 + $0x38] sm:$0xff]
      %v898 = vld [vmem:[%s7 + $0x40] sm:$0xff]
      %v899 = vld [vmem:[%s7 + $0x48] sm:$0xff]
      %v900 = vld [vmem:[%s7 + $0x50] sm:$0xff]
      %v901 = vld [vmem:[%s7 + $0x58] sm:$0xff]
      %v902 = vld [vmem:[%s7 + $0x60] sm:$0xff]
      %v903 = vld [vmem:[%s7 + $0x68] sm:$0xff]
      %v904 = vld [vmem:[%s7 + $0x70] sm:$0xff]
      %v905 = vld [vmem:[%s7 + $0x78] sm:$0xff]
      %v906 = vlaneseq
      %v907 = vshrl.u32 %v906, 7
      %v908 = vadd.s32 %v907, 8
      %v909 = vadd.s32 %v907, 16
      %v910 = vadd.s32 %v907, 24
      %v911 = vadd.s32 %v907, 32
      %v912 = vadd.s32 %v907, 40
      %v913 = vadd.s32 %v907, 48
      %v914 = vadd.s32 %v907, 56
      %v915 = vadd.s32 %v907, 64
      %v916 = vadd.s32 %v907, 72
      %v917 = vadd.s32 %v907, 80
      %v918 = vadd.s32 %v907, 88
      %v919 = vadd.s32 %v907, 96
      %v920 = vadd.s32 %v907, 104
      %v921 = vadd.s32 %v907, 112
      %v922 = vadd.s32 %v907, 120
      %v923 = vlaneseq
      %v924 = vand.u32 %v923, 127
      %vm925 = vcmp.eq.s32.totalorder %v907, %v924
      %vm926 = vcmp.eq.s32.totalorder %v908, %v924
      %vm927 = vcmp.eq.s32.totalorder %v909, %v924
      %vm928 = vcmp.eq.s32.totalorder %v910, %v924
      %vm929 = vcmp.eq.s32.totalorder %v911, %v924
      %vm930 = vcmp.eq.s32.totalorder %v912, %v924
      %vm931 = vcmp.eq.s32.totalorder %v913, %v924
      %vm932 = vcmp.eq.s32.totalorder %v914, %v924
      %vm933 = vcmp.eq.s32.totalorder %v915, %v924
      %vm934 = vcmp.eq.s32.totalorder %v916, %v924
      %vm935 = vcmp.eq.s32.totalorder %v917, %v924
      %vm936 = vcmp.eq.s32.totalorder %v918, %v924
      %vm937 = vcmp.eq.s32.totalorder %v919, %v924
      %vm938 = vcmp.eq.s32.totalorder %v920, %v924
      %vm939 = vcmp.eq.s32.totalorder %v921, %v924
      %vm940 = vcmp.eq.s32.totalorder %v922, %v924
      %942 = vset.pattern.permute.xlu0 0
      %943 = vperm.xlu0 %942, %v890
      %v944 = vpop.permute.xlu0 %943
      %947 = vset.pattern.permute.xlu0 0
      %948 = vperm.xlu0 %947, %v891
      %v949 = vpop.permute.xlu0 %948
      %952 = vset.pattern.permute.xlu0 0
      %953 = vperm.xlu0 %952, %v892
      %v954 = vpop.permute.xlu0 %953
      %957 = vset.pattern.permute.xlu0 0
      %958 = vperm.xlu0 %957, %v893
      %v959 = vpop.permute.xlu0 %958
      %962 = vset.pattern.permute.xlu0 0
      %963 = vperm.xlu0 %962, %v894
      %v964 = vpop.permute.xlu0 %963
      %967 = vset.pattern.permute.xlu0 0
      %968 = vperm.xlu0 %967, %v895
      %v969 = vpop.permute.xlu0 %968
      %972 = vset.pattern.permute.xlu0 0
      %973 = vperm.xlu0 %972, %v896
      %v974 = vpop.permute.xlu0 %973
      %977 = vset.pattern.permute.xlu0 0
      %978 = vperm.xlu0 %977, %v897
      %v979 = vpop.permute.xlu0 %978
      %982 = vset.pattern.permute.xlu0 0
      %983 = vperm.xlu0 %982, %v898
      %v984 = vpop.permute.xlu0 %983
      %987 = vset.pattern.permute.xlu0 0
      %988 = vperm.xlu0 %987, %v899
      %v989 = vpop.permute.xlu0 %988
      %992 = vset.pattern.permute.xlu0 0
      %993 = vperm.xlu0 %992, %v900
      %v994 = vpop.permute.xlu0 %993
      %997 = vset.pattern.permute.xlu0 0
      %998 = vperm.xlu0 %997, %v901
      %v999 = vpop.permute.xlu0 %998
      %1002 = vset.pattern.permute.xlu0 0
      %1003 = vperm.xlu0 %1002, %v902
      %v1004 = vpop.permute.xlu0 %1003
      %1007 = vset.pattern.permute.xlu0 0
      %1008 = vperm.xlu0 %1007, %v903
      %v1009 = vpop.permute.xlu0 %1008
      %1012 = vset.pattern.permute.xlu0 0
      %1013 = vperm.xlu0 %1012, %v904
      %v1014 = vpop.permute.xlu0 %1013
      %1017 = vset.pattern.permute.xlu0 0
      %1018 = vperm.xlu0 %1017, %v905
      %v1019 = vpop.permute.xlu0 %1018
      %v1021 = vsel %vm925, %v944, 0.0
      %v1022 = vsel %vm926, %v949, 0.0
      %v1023 = vsel %vm927, %v954, 0.0
      %v1024 = vsel %vm928, %v959, 0.0
      %v1025 = vsel %vm929, %v964, 0.0
      %v1026 = vsel %vm930, %v969, 0.0
      %v1027 = vsel %vm931, %v974, 0.0
      %v1028 = vsel %vm932, %v979, 0.0
      %v1029 = vsel %vm933, %v984, 0.0
      %v1030 = vsel %vm934, %v989, 0.0
      %v1031 = vsel %vm935, %v994, 0.0
      %v1032 = vsel %vm936, %v999, 0.0
      %v1033 = vsel %vm937, %v1004, 0.0
      %v1034 = vsel %vm938, %v1009, 0.0
      %v1035 = vsel %vm939, %v1014, 0.0
      %v1036 = vsel %vm940, %v1019, 0.0
      %v1037 = vadd.f32 %v874, %v1021
      %v1038 = vadd.f32 %v875, %v1022
      %v1039 = vadd.f32 %v876, %v1023
      %v1040 = vadd.f32 %v877, %v1024
      %v1041 = vadd.f32 %v878, %v1025
      %v1042 = vadd.f32 %v879, %v1026
      %v1043 = vadd.f32 %v880, %v1027
      %v1044 = vadd.f32 %v881, %v1028
      %v1045 = vadd.f32 %v882, %v1029
      %v1046 = vadd.f32 %v883, %v1030
      %v1047 = vadd.f32 %v884, %v1031
      %v1048 = vadd.f32 %v885, %v1032
      %v1049 = vadd.f32 %v886, %v1033
      %v1050 = vadd.f32 %v887, %v1034
      %v1051 = vadd.f32 %v888, %v1035
      %v1052 = vadd.f32 %v889, %v1036
      %1053 = vst [vmem:[#allocation5] sm:$0xff] %v1037
      %1054 = vst [vmem:[#allocation5 + $0x8] sm:$0xff] %v1038
      %1055 = vst [vmem:[#allocation5 + $0x10] sm:$0xff] %v1039
      %1056 = vst [vmem:[#allocation5 + $0x18] sm:$0xff] %v1040
      %1057 = vst [vmem:[#allocation5 + $0x20] sm:$0xff] %v1041
      %1058 = vst [vmem:[#allocation5 + $0x28] sm:$0xff] %v1042
      %1059 = vst [vmem:[#allocation5 + $0x30] sm:$0xff] %v1043
      %1060 = vst [vmem:[#allocation5 + $0x38] sm:$0xff] %v1044
      %1061 = vst [vmem:[#allocation5 + $0x40] sm:$0xff] %v1045
      %1062 = vst [vmem:[#allocation5 + $0x48] sm:$0xff] %v1046
      %1063 = vst [vmem:[#allocation5 + $0x50] sm:$0xff] %v1047
      %1064 = vst [vmem:[#allocation5 + $0x58] sm:$0xff] %v1048
      %1065 = vst [vmem:[#allocation5 + $0x60] sm:$0xff] %v1049
      %1066 = vst [vmem:[#allocation5 + $0x68] sm:$0xff] %v1050
      %1067 = vst [vmem:[#allocation5 + $0x70] sm:$0xff] %v1051
      %1068 = vst [vmem:[#allocation5 + $0x78] sm:$0xff] %v1052
    $region45: #{tpu_custom_call.1} parent=1 // pred_fallthru
      _
    %p1069 = scmp.lt.s32.totalorder 0, 0
    // Predicated region
    $region46: #{tpu_custom_call.1} parent=1 // pred_check
      %p1070 = pneg %p1069
    $region47: #{tpu_custom_call.1} parent=1 // pred_check_branch
      %1072 = sbr.rel (%p1070) target = $region49
    $region48: #{tpu_custom_call.1} parent=1 // pred_region
      %1073 = vst [vmem:[#allocation5] sm:$0xff] 0.0
      %1074 = vst [vmem:[#allocation5 + $0x8] sm:$0xff] 0.0
      %1075 = vst [vmem:[#allocation5 + $0x10] sm:$0xff] 0.0
      %1076 = vst [vmem:[#allocation5 + $0x18] sm:$0xff] 0.0
      %1077 = vst [vmem:[#allocation5 + $0x20] sm:$0xff] 0.0
      %1078 = vst [vmem:[#allocation5 + $0x28] sm:$0xff] 0.0
      %1079 = vst [vmem:[#allocation5 + $0x30] sm:$0xff] 0.0
      %1080 = vst [vmem:[#allocation5 + $0x38] sm:$0xff] 0.0
      %1081 = vst [vmem:[#allocation5 + $0x40] sm:$0xff] 0.0
      %1082 = vst [vmem:[#allocation5 + $0x48] sm:$0xff] 0.0
      %1083 = vst [vmem:[#allocation5 + $0x50] sm:$0xff] 0.0
      %1084 = vst [vmem:[#allocation5 + $0x58] sm:$0xff] 0.0
      %1085 = vst [vmem:[#allocation5 + $0x60] sm:$0xff] 0.0
      %1086 = vst [vmem:[#allocation5 + $0x68] sm:$0xff] 0.0
      %1087 = vst [vmem:[#allocation5 + $0x70] sm:$0xff] 0.0
      %1088 = vst [vmem:[#allocation5 + $0x78] sm:$0xff] 0.0
    $region49: #{tpu_custom_call.1} parent=1 // pred_fallthru
      _
    // Predicated region
    $region50: #{tpu_custom_call.1} parent=1 // pred_check
      _
    $region51: #{tpu_custom_call.1} parent=1 // pred_check_branch
      %1090 = sbr.rel (0) target = $region53
    $region52: #{tpu_custom_call.1} parent=1 // pred_region
      %s1092 = ssub.s32 2048, 2048
      %1093 = vsyncadd [#allocation3], %s1092
      %s1094 = sshll.u32 [#allocation5], 4
      %s1095 = int_to_ptr.vmem [resolvable:$true] %s1094
      %1100 = dma.vmem_to_hbm [thread:$0]  %s1095, 2048, %s8, [#allocation3], 128, 128, 8
    $region53: #{tpu_custom_call.1} parent=1 // pred_fallthru
      _
    // Predicated region
    $region54: #{tpu_custom_call.1} parent=1 // pred_check
      _
    $region55: #{tpu_custom_call.1} parent=1 // pred_check_branch
      %1102 = sbr.rel (0) target = $region57
    $region56: #{tpu_custom_call.1} parent=1 // pred_region
      %1103 = dma.done [#allocation3], 2048
    $region57: #{tpu_custom_call.1} parent=1 // pred_fallthru
      _
    %1104 = vsyncpa [#allocation3], 1
    %1105 = vsyncpa [#allocation4], 1

</llo_original>
